<compile_context>
chip_gen: v6e
topology: v6e:2x2x1
jax: 0.10.0
libtpu: 0.0.40
codegen_flags: <defaults>
</compile_context>

<pallas_src>
import jax
import jax.numpy as jnp
from jax.experimental import pallas as pl
from jax.experimental.pallas import tpu as pltpu


# ----------------------------------------------------------------------------
# kernel
# ----------------------------------------------------------------------------
def _nearest_upsample_kernel(x_ref, e_ref, out_ref):
    """One row band: x (band, k*W) @ E (k*W, k*sh*W*sw) -> out (band, k*sh*W*sw).

    E is a 0/1 selection matrix, so this is an exact copy/expand executed on
    the otherwise idle MXU; no cross-lane reshapes or sublane broadcasts.
    """
    x = x_ref[...]
    if x.dtype != e_ref.dtype:
        # TODO(synk): integer inputs go through f32 (exact up to 2**24).
        x = x.astype(e_ref.dtype)
    out_ref[...] = jnp.dot(
        x, e_ref[...], preferred_element_type=jnp.float32
    ).astype(out_ref.dtype)


# ----------------------------------------------------------------------------
# helpers
# ----------------------------------------------------------------------------
def _round_up(a, b):
    return (a + b - 1) // b * b


def _normalize_scale(scale_factor):
    sf = tuple(scale_factor) if isinstance(scale_factor, (tuple, list)) \
        else (scale_factor, scale_factor)
    out = []
    for s in sf:
        si = int(round(float(s)))
        # TODO(synk): non-integer scale factors are not implemented.
        assert si >= 1 and abs(float(s) - si) < 1e-9, "integer scale factors only"
        out.append(si)
    return tuple(out)


def _vmem_capacity_bytes():
    """Physical VMEM of the local device; conservative fallback (v7x = 64 MiB)."""
    try:
        info = pltpu.get_tpu_info()
        cap = getattr(info, "vmem_capacity_bytes", None)
        if cap:
            return int(cap)
    except Exception:
        pass
    return 64 * 1024 * 1024


def _pick_fold(n_rows, w, max_k=16, target_lanes=128):
    """Largest k <= max_k dividing n_rows with k*w <= target_lanes.

    Folding k rows into the lane axis keeps blocks lane-dense for small W
    (e.g. ResNet spatial sizes 7..56); the selection matmul then performs the
    height repeat too, and MXU FLOPs stay far under the HBM roofline."""
    if w >= target_lanes:
        return 1
    best = 1
    for k in range(2, max_k + 1):
        if n_rows % k == 0 and k * w <= target_lanes:
            best = k
    return best


def _pick_row_band(n_rows, per_row_bytes, budget_bytes, min_steps=4, max_band=2048):
    """Multiple-of-8 row band whose double-buffered blocks fit `budget_bytes`,
    leaving a few grid steps for DMA/compute overlap and 2-TC sharding."""
    cap = budget_bytes // max(per_row_bytes, 1)
    cap = min(cap, max_band)
    if n_rows >= 8 * min_steps:
        cap = min(cap, n_rows // min_steps)
    band = (cap // 8) * 8
    if band < 8 or band >= n_rows:
        return n_rows          # full extent: single block, always legal
    return band


# ----------------------------------------------------------------------------
# wrapper
# ----------------------------------------------------------------------------
def interpolate_nearest(x, scale_factor):
    """F.interpolate(x, scale_factor, mode='nearest') for NCHW input."""
    sh, sw = _normalize_scale(scale_factor)
    N, C, H, W = x.shape
    if sh == 1 and sw == 1:
        return x

    R = N * C * H
    Wout = W * sw

    compute_dtype = x.dtype if jnp.issubdtype(x.dtype, jnp.floating) \
        else jnp.float32

    # Fold k rows into the lane axis when W is lane-sparse.
    k = _pick_fold(R, W)
    Rg = R // k
    kW = k * W
    kOut = k * sh * Wout

    # Metadata-only view change (no transpose, no padding, no extra HBM pass).
    x2 = x.reshape(Rg, kW)

    # Constant 0/1 selection matrix encoding BOTH repeats:
    #   E[j*W + w, ((j*sh + d)*W + w')*sw + dw] = 1  iff  w' == w.
    # Fetched with a constant index_map, so it stays resident in VMEM.
    a = jnp.arange(kW)
    b = jnp.arange(kOut)
    row_match = (b[None, :] // (sh * Wout)) == (a[:, None] // W)
    col_match = ((b[None, :] % Wout) // sw) == (a[:, None] % W)
    e = (row_match & col_match).astype(compute_dtype)

    # Generation-aware VMEM budgeting (64 MiB v7x, 128 MiB v5e/v6e).
    capacity = _vmem_capacity_bytes()
    x_size = jnp.dtype(x.dtype).itemsize
    cd_size = jnp.dtype(compute_dtype).itemsize
    e_block = _round_up(kW, 8) * _round_up(kOut, 128) * cd_size   # per buffer
    budget = int(0.70 * capacity) - 2 * e_block                   # E is 2x-buffered
    budget = max(budget, 2 * 1024 * 1024)
    per_row = 2 * (_round_up(kW, 128) + _round_up(kOut, 128)) * x_size
    band = _pick_row_band(Rg, per_row, budget)
    grid = (pl.cdiv(Rg, band),)
    vmem_limit = int(min(capacity, budget + 2 * e_block + 8 * 1024 * 1024))

    out2 = pl.pallas_call(
        _nearest_upsample_kernel,
        out_shape=jax.ShapeDtypeStruct((Rg, kOut), x.dtype),
        grid_spec=pltpu.PrefetchScalarGridSpec(
            num_scalar_prefetch=0,
            grid=grid,
            in_specs=[
                pl.BlockSpec((band, kW), lambda i: (i, 0)),    # row band
                pl.BlockSpec((kW, kOut), lambda i: (0, 0)),    # selection E
            ],
            out_specs=pl.BlockSpec((band, kOut), lambda i: (i, 0)),
        ),
        compiler_params=pltpu.CompilerParams(
            dimension_semantics=("parallel",),
            vmem_limit_bytes=vmem_limit,
        ),
    )(x2, e)

    # (Rg, k*sh*Wout) row-major is exactly (N, C, H*sh, W*sw) row-major.
    return out2.reshape(N, C, H * sh, Wout)


class Interpolate:
    """Pallas-backed equivalent of the PyTorch Interpolate module."""

    def __init__(self, scale_factor, mode="nearest"):
        # TODO(synk): only mode='nearest' has a Pallas implementation here.
        assert mode == "nearest", "only nearest-neighbor interpolation implemented"
        self.scale_factor = scale_factor
        self.mode = mode

    def __call__(self, x):
        return interpolate_nearest(x, self.scale_factor)


# ----------------------------------------------------------------------------
# self-test
# ----------------------------------------------------------------------------
if __name__ == "__main__":
    key = jax.random.PRNGKey(0)
    N, C, H, W = 2, 4, 16, 16
    scale = 2
    x = jax.random.normal(key, (N, C, H, W), jnp.float32)

    interp = Interpolate(scale_factor=scale, mode="nearest")
    out = jax.block_until_ready(interp(x))

    # Pure-JAX reference of nearest-neighbor upsampling with integer scale.
    ref = jnp.repeat(jnp.repeat(x, scale, axis=2), scale, axis=3)

    assert out.shape == (N, C, H * scale, W * scale)
    err = jnp.max(jnp.abs(out - ref))
    assert jnp.allclose(out, ref, rtol=1e-5, atol=1e-6), f"max abs err {err}"
    print("KERNEL_OK")
</pallas_src>

<mosaic_0001>
module attributes {stable_mosaic.version = 11 : i64} {
  func.func @_nearest_upsample_kernel(%arg0: i32, %arg1: memref<16x128xf32, #tpu.memory_space<vmem>>, %arg2: memref<128x512xf32, #tpu.memory_space<vmem>>, %arg3: memref<16x512xf32, #tpu.memory_space<vmem>>) attributes {dimension_semantics = [#tpu.dimension_semantics<parallel>], iteration_bounds = array<i64: 1>, scalar_prefetch = 0 : i64, scratch_operands = 0 : i64, tpu.core_type = #tpu.core_type<tc>, window_params = [{transform_indices = @transform_0, window_bounds = array<i64: 16, 128>}, {pipeline_mode = #tpu.pipeline_mode<synchronous>, transform_indices = @transform_1, window_bounds = array<i64: 128, 512>}, {transform_indices = @transform_2, window_bounds = array<i64: 16, 512>}]} {
    %c0 = arith.constant 0 : index
    %c0_0 = arith.constant 0 : index
    %0 = vector.load %arg1[%c0, %c0_0] : memref<16x128xf32, #tpu.memory_space<vmem>>, vector<16x128xf32>
    %c0_1 = arith.constant 0 : index
    %c0_2 = arith.constant 0 : index
    %1 = vector.load %arg2[%c0_1, %c0_2] : memref<128x512xf32, #tpu.memory_space<vmem>>, vector<128x512xf32>
    %cst = arith.constant dense<0.000000e+00> : vector<16x512xf32>
    %2 = tpu.matmul %0, %1, %cst {dimension_numbers = #tpu.dot_dimension_numbers<[1], [0], [0], [1], [0, 0, 1, 1], [], []>} : vector<16x128xf32>, vector<128x512xf32>, vector<16x512xf32> -> vector<16x512xf32>
    %c0_3 = arith.constant 0 : index
    %c0_4 = arith.constant 0 : index
    %3 = vector.load %arg3[%c0_3, %c0_4] : memref<16x512xf32, #tpu.memory_space<vmem>>, vector<16x512xf32>
    tpu.vector_store %arg3[%c0_3, %c0_4], %2 {strides = array<i32>} : memref<16x512xf32, #tpu.memory_space<vmem>>, vector<16x512xf32>,
    return
  }
  func.func @transform_0(%arg0: i32) -> (i32, i32) {
    %c0_i32 = arith.constant 0 : i32
    %c0_i32_0 = arith.constant 0 : i32
    return %arg0, %c0_i32 : i32, i32
  }
  func.func @transform_1(%arg0: i32) -> (i32, i32) {
    %c0_i32 = arith.constant 0 : i32
    %c0_i32_0 = arith.constant 0 : i32
    %c0_i32_1 = arith.constant 0 : i32
    return %c0_i32, %c0_i32_0 : i32, i32
  }
  func.func @transform_2(%arg0: i32) -> (i32, i32) {
    %c0_i32 = arith.constant 0 : i32
    %c0_i32_0 = arith.constant 0 : i32
    return %arg0, %c0_i32 : i32, i32
  }
}

</mosaic_0001>

<llo_original>
// kernel: tpu_custom_call.1
$region0: #{tpu_custom_call.1}
  #allocation0 [shape = 'u32[]', space=smem, size = 0x4, offset = 0x4, fixed_abs, tag = 'smem constant byte address 0x4 - core index']
  #allocation1 [shape = 'u32[144,128]{1,0:T(1,128)}', space=vmem, size = 0x12000, scoped, tag = 'internal scratch']
  %s0 = inlined_call_operand.hbm [shape: f32[16,128], index: 0, kind: input, shape index: {}]
  %s1 = inlined_call_operand.hbm [shape: f32[128,512], index: 1, kind: input, shape index: {}]
  %s2 = inlined_call_operand.hbm [shape: f32[16,512], index: 2, kind: output, shape index: {}]
  %s3 = sld [smem:[#allocation0]]
  $region26: #{tpu_custom_call.1} parent=0
    _
  %s5 = ssub.s32 1, %s3
  %s6 = scalar_select 0, %s5, %s3
  $region1: #{tpu_custom_call.1} parent=0
    #allocation2 [shape = 'u8[8192]{0}', space=vmem, size = 0x2000, scoped, tag = 'input window, operand 0, single buffered']
    #allocation3 [shape = 's32[1]{0}', space=sflag, size = 0x4, scoped, tag = 'scoped memory for tpu_custom_call.1']
    #allocation4 [shape = 's32[1]{0}', space=sflag, size = 0x4, scoped, tag = 'scoped memory for tpu_custom_call.1']
    #allocation5 [shape = 'u8[262144]{0}', space=vmem, size = 0x40000, scoped, tag = 'input window, operand 1, single buffered']
    #allocation6 [shape = 's32[1]{0}', space=sflag, size = 0x4, scoped, tag = 'scoped memory for tpu_custom_call.1']
    #allocation7 [shape = 'u8[32768]{0}', space=vmem, size = 0x8000, scoped, tag = 'output window, operand 0, single buffered']
    %7 = vsyncpa [#allocation3], 0
    %8 = vsyncpa [#allocation6], 0
    %9 = vsyncpa [#allocation4], 0
    // Predicated region
    $region2: #{tpu_custom_call.1} parent=1 // pred_check
      _
    $region3: #{tpu_custom_call.1} parent=1 // pred_check_branch
      %11 = sbr.rel (0) target = $region5
    $region4: #{tpu_custom_call.1} parent=1 // pred_region
      %s13 = ssub.s32 256, 256
      %14 = vsyncadd [#allocation3], %s13
      %s15 = sshll.u32 [#allocation2], 4
      %s16 = int_to_ptr.vmem [resolvable:$true] %s15
      %21 = dma.hbm_to_vmem [thread:$0]  %s0, 256, %s16, [#allocation3], 128, 128, 8
    $region5: #{tpu_custom_call.1} parent=1 // pred_fallthru
      _
    // Predicated region
    $region6: #{tpu_custom_call.1} parent=1 // pred_check
      _
    $region7: #{tpu_custom_call.1} parent=1 // pred_check_branch
      %23 = sbr.rel (0) target = $region9
    $region8: #{tpu_custom_call.1} parent=1 // pred_region
      %s25 = ssub.s32 8192, 8192
      %26 = vsyncadd [#allocation6], %s25
      %s27 = sshll.u32 [#allocation5], 4
      %s28 = int_to_ptr.vmem [resolvable:$true] %s27
      %33 = dma.hbm_to_vmem [thread:$0]  %s1, 8192, %s28, [#allocation6], 512, 512, 32
    $region9: #{tpu_custom_call.1} parent=1 // pred_fallthru
      _
    // Predicated region
    $region10: #{tpu_custom_call.1} parent=1 // pred_check
      _
    $region11: #{tpu_custom_call.1} parent=1 // pred_check_branch
      %35 = sbr.rel (0) target = $region13
    $region12: #{tpu_custom_call.1} parent=1 // pred_region
      %36 = dma.done [#allocation3], 256
    $region13: #{tpu_custom_call.1} parent=1 // pred_fallthru
      _
    // Predicated region
    $region14: #{tpu_custom_call.1} parent=1 // pred_check
      _
    $region15: #{tpu_custom_call.1} parent=1 // pred_check_branch
      %38 = sbr.rel (0) target = $region17
    $region16: #{tpu_custom_call.1} parent=1 // pred_region
      %39 = dma.done [#allocation6], 8192
    $region17: #{tpu_custom_call.1} parent=1 // pred_fallthru
      _
    %v40 = vld [vmem:[#allocation2] sm:$0xff]
    %v41 = vld [vmem:[#allocation2 + $0x8] sm:$0xff]
    %v42 = vld [vmem:[#allocation5] sm:$0xff]
    %v43 = vld [vmem:[#allocation5 + $0x8] sm:$0xff]
    %v44 = vld [vmem:[#allocation5 + $0x10] sm:$0xff]
    %v45 = vld [vmem:[#allocation5 + $0x18] sm:$0xff]
    %v46 = vld [vmem:[#allocation5 + $0x20] sm:$0xff]
    %v47 = vld [vmem:[#allocation5 + $0x28] sm:$0xff]
    %v48 = vld [vmem:[#allocation5 + $0x30] sm:$0xff]
    %v49 = vld [vmem:[#allocation5 + $0x38] sm:$0xff]
    %v50 = vld [vmem:[#allocation5 + $0x40] sm:$0xff]
    %v51 = vld [vmem:[#allocation5 + $0x48] sm:$0xff]
    %v52 = vld [vmem:[#allocation5 + $0x50] sm:$0xff]
    %v53 = vld [vmem:[#allocation5 + $0x58] sm:$0xff]
    %v54 = vld [vmem:[#allocation5 + $0x60] sm:$0xff]
    %v55 = vld [vmem:[#allocation5 + $0x68] sm:$0xff]
    %v56 = vld [vmem:[#allocation5 + $0x70] sm:$0xff]
    %v57 = vld [vmem:[#allocation5 + $0x78] sm:$0xff]
    %v58 = vld [vmem:[#allocation5 + $0x80] sm:$0xff]
    %v59 = vld [vmem:[#allocation5 + $0x88] sm:$0xff]
    %v60 = vld [vmem:[#allocation5 + $0x90] sm:$0xff]
    %v61 = vld [vmem:[#allocation5 + $0x98] sm:$0xff]
    %v62 = vld [vmem:[#allocation5 + $0xa0] sm:$0xff]
    %v63 = vld [vmem:[#allocation5 + $0xa8] sm:$0xff]
    %v64 = vld [vmem:[#allocation5 + $0xb0] sm:$0xff]
    %v65 = vld [vmem:[#allocation5 + $0xb8] sm:$0xff]
    %v66 = vld [vmem:[#allocation5 + $0xc0] sm:$0xff]
    %v67 = vld [vmem:[#allocation5 + $0xc8] sm:$0xff]
    %v68 = vld [vmem:[#allocation5 + $0xd0] sm:$0xff]
    %v69 = vld [vmem:[#allocation5 + $0xd8] sm:$0xff]
    %v70 = vld [vmem:[#allocation5 + $0xe0] sm:$0xff]
    %v71 = vld [vmem:[#allocation5 + $0xe8] sm:$0xff]
    %v72 = vld [vmem:[#allocation5 + $0xf0] sm:$0xff]
    %v73 = vld [vmem:[#allocation5 + $0xf8] sm:$0xff]
    %v74 = vld [vmem:[#allocation5 + $0x100] sm:$0xff]
    %v75 = vld [vmem:[#allocation5 + $0x108] sm:$0xff]
    %v76 = vld [vmem:[#allocation5 + $0x110] sm:$0xff]
    %v77 = vld [vmem:[#allocation5 + $0x118] sm:$0xff]
    %v78 = vld [vmem:[#allocation5 + $0x120] sm:$0xff]
    %v79 = vld [vmem:[#allocation5 + $0x128] sm:$0xff]
    %v80 = vld [vmem:[#allocation5 + $0x130] sm:$0xff]
    %v81 = vld [vmem:[#allocation5 + $0x138] sm:$0xff]
    %v82 = vld [vmem:[#allocation5 + $0x140] sm:$0xff]
    %v83 = vld [vmem:[#allocation5 + $0x148] sm:$0xff]
    %v84 = vld [vmem:[#allocation5 + $0x150] sm:$0xff]
    %v85 = vld [vmem:[#allocation5 + $0x158] sm:$0xff]
    %v86 = vld [vmem:[#allocation5 + $0x160] sm:$0xff]
    %v87 = vld [vmem:[#allocation5 + $0x168] sm:$0xff]
    %v88 = vld [vmem:[#allocation5 + $0x170] sm:$0xff]
    %v89 = vld [vmem:[#allocation5 + $0x178] sm:$0xff]
    %v90 = vld [vmem:[#allocation5 + $0x180] sm:$0xff]
    %v91 = vld [vmem:[#allocation5 + $0x188] sm:$0xff]
    %v92 = vld [vmem:[#allocation5 + $0x190] sm:$0xff]
    %v93 = vld [vmem:[#allocation5 + $0x198] sm:$0xff]
    %v94 = vld [vmem:[#allocation5 + $0x1a0] sm:$0xff]
    %v95 = vld [vmem:[#allocation5 + $0x1a8] sm:$0xff]
    %v96 = vld [vmem:[#allocation5 + $0x1b0] sm:$0xff]
    %v97 = vld [vmem:[#allocation5 + $0x1b8] sm:$0xff]
    %v98 = vld [vmem:[#allocation5 + $0x1c0] sm:$0xff]
    %v99 = vld [vmem:[#allocation5 + $0x1c8] sm:$0xff]
    %v100 = vld [vmem:[#allocation5 + $0x1d0] sm:$0xff]
    %v101 = vld [vmem:[#allocation5 + $0x1d8] sm:$0xff]
    %v102 = vld [vmem:[#allocation5 + $0x1e0] sm:$0xff]
    %v103 = vld [vmem:[#allocation5 + $0x1e8] sm:$0xff]
    %v104 = vld [vmem:[#allocation5 + $0x1f0] sm:$0xff]
    %v105 = vld [vmem:[#allocation5 + $0x1f8] sm:$0xff]
    %106 = vmatprep.subr.mxu0 %v103
    %107 = vmatpush1.msra.mxu0 %v102
    %108 = vmatprep.subr.mxu0 %v99
    %109 = vmatpush1.msra.mxu0 %v98
    %110 = vmatprep.subr.mxu0 %v95
    %111 = vmatpush1.msra.mxu0 %v94
    %112 = vmatprep.subr.mxu0 %v91
    %113 = vmatpush1.msra.mxu0 %v90
    %114 = vmatprep.subr.mxu0 %v87
    %115 = vmatpush1.msra.mxu0 %v86
    %116 = vmatprep.subr.mxu0 %v83
    %117 = vmatpush1.msra.mxu0 %v82
    %118 = vmatprep.subr.mxu0 %v79
    %119 = vmatpush1.msra.mxu0 %v78
    %120 = vmatprep.subr.mxu0 %v75
    %121 = vmatpush1.msra.mxu0 %v74
    %122 = vmatprep.subr.mxu0 %v71
    %123 = vmatpush1.msra.mxu0 %v70
    %124 = vmatprep.subr.mxu0 %v67
    %125 = vmatpush1.msra.mxu0 %v66
    %126 = vmatprep.subr.mxu0 %v63
    %127 = vmatpush1.msra.mxu0 %v62
    %128 = vmatprep.subr.mxu0 %v59
    %129 = vmatpush1.msra.mxu0 %v58
    %130 = vmatprep.subr.mxu0 %v55
    %131 = vmatpush1.msra.mxu0 %v54
    %132 = vmatprep.subr.mxu0 %v51
    %133 = vmatpush1.msra.mxu0 %v50
    %134 = vmatprep.subr.mxu0 %v47
    %135 = vmatpush1.msra.mxu0 %v46
    %136 = vmatprep.subr.mxu0 %v43
    %137 = vmatpush1.msra.mxu0 %v42
    %138 = vmatprep.subr.mxu0 0.0
    %139 = vmatpush2.msra.mxu0 0.0
    %140 = vmatprep.subr.mxu0 0.0
    %141 = vmatpush2.msra.mxu0 0.0
    %142 = vmatprep.subr.mxu0 0.0
    %143 = vmatpush2.msra.mxu0 0.0
    %144 = vmatprep.subr.mxu0 0.0
    %145 = vmatpush2.msra.mxu0 0.0
    %146 = vmatprep.subr.mxu0 0.0
    %147 = vmatpush2.msra.mxu0 0.0
    %148 = vmatprep.subr.mxu0 0.0
    %149 = vmatpush2.msra.mxu0 0.0
    %150 = vmatprep.subr.mxu0 0.0
    %151 = vmatpush2.msra.mxu0 0.0
    %152 = vmatprep.subr.mxu0 0.0
    %153 = vmatpush2.msra.mxu0 0.0
    %154 = vmatprep.subr.mxu0 0.0
    %155 = vmatpush2.msra.mxu0 0.0
    %156 = vmatprep.subr.mxu0 0.0
    %157 = vmatpush2.msra.mxu0 0.0
    %158 = vmatprep.subr.mxu0 0.0
    %159 = vmatpush2.msra.mxu0 0.0
    %160 = vmatprep.subr.mxu0 0.0
    %161 = vmatpush2.msra.mxu0 0.0
    %162 = vmatprep.subr.mxu0 0.0
    %163 = vmatpush2.msra.mxu0 0.0
    %164 = vmatprep.subr.mxu0 0.0
    %165 = vmatpush2.msra.mxu0 0.0
    %166 = vmatprep.subr.mxu0 0.0
    %167 = vmatpush2.msra.mxu0 0.0
    %168 = vmatprep.subr.mxu0 0.0
    %169 = vmatpush2.msra.mxu0 0.0
    %170 = vmatprep.mubr.f32.mxu0 0.0
    %171 = vmatmul.mubr.f32.gmra.mxu0 %v40
    %v172 = vpop.f32.mrf.mxu0
    %v173 = vadd.f32 0.0, %v172
    %v174 = vpop.f32.mrf.mxu0
    %v175 = vadd.f32 0.0, %v174
    %176 = vmatprep.mubr.f32.mxu0 0.0
    %177 = vmatmul.mubr.f32.gmra.mxu0 %v41
    %v178 = vpop.f32.mrf.mxu0
    %v179 = vadd.f32 0.0, %v178
    %v180 = vpop.f32.mrf.mxu0
    %v181 = vadd.f32 0.0, %v180
    %182 = vdwg.mxu0
    %183 = vmatprep.subr.mxu0 %v105
    %184 = vmatpush1.msra.mxu0 %v104
    %185 = vmatprep.subr.mxu0 %v101
    %186 = vmatpush1.msra.mxu0 %v100
    %187 = vmatprep.subr.mxu0 %v97
    %188 = vmatpush1.msra.mxu0 %v96
    %189 = vmatprep.subr.mxu0 %v93
    %190 = vmatpush1.msra.mxu0 %v92
    %191 = vmatprep.subr.mxu0 %v89
    %192 = vmatpush1.msra.mxu0 %v88
    %193 = vmatprep.subr.mxu0 %v85
    %194 = vmatpush1.msra.mxu0 %v84
    %195 = vmatprep.subr.mxu0 %v81
    %196 = vmatpush1.msra.mxu0 %v80
    %197 = vmatprep.subr.mxu0 %v77
    %198 = vmatpush1.msra.mxu0 %v76
    %199 = vmatprep.subr.mxu0 %v73
    %200 = vmatpush1.msra.mxu0 %v72
    %201 = vmatprep.subr.mxu0 %v69
    %202 = vmatpush1.msra.mxu0 %v68
    %203 = vmatprep.subr.mxu0 %v65
    %204 = vmatpush1.msra.mxu0 %v64
    %205 = vmatprep.subr.mxu0 %v61
    %206 = vmatpush1.msra.mxu0 %v60
    %207 = vmatprep.subr.mxu0 %v57
    %208 = vmatpush1.msra.mxu0 %v56
    %209 = vmatprep.subr.mxu0 %v53
    %210 = vmatpush1.msra.mxu0 %v52
    %211 = vmatprep.subr.mxu0 %v49
    %212 = vmatpush1.msra.mxu0 %v48
    %213 = vmatprep.subr.mxu0 %v45
    %214 = vmatpush1.msra.mxu0 %v44
    %215 = vmatprep.subr.mxu0 0.0
    %216 = vmatpush2.msra.mxu0 0.0
    %217 = vmatprep.subr.mxu0 0.0
    %218 = vmatpush2.msra.mxu0 0.0
    %219 = vmatprep.subr.mxu0 0.0
    %220 = vmatpush2.msra.mxu0 0.0
    %221 = vmatprep.subr.mxu0 0.0
    %222 = vmatpush2.msra.mxu0 0.0
    %223 = vmatprep.subr.mxu0 0.0
    %224 = vmatpush2.msra.mxu0 0.0
    %225 = vmatprep.subr.mxu0 0.0
    %226 = vmatpush2.msra.mxu0 0.0
    %227 = vmatprep.subr.mxu0 0.0
    %228 = vmatpush2.msra.mxu0 0.0
    %229 = vmatprep.subr.mxu0 0.0
    %230 = vmatpush2.msra.mxu0 0.0
    %231 = vmatprep.subr.mxu0 0.0
    %232 = vmatpush2.msra.mxu0 0.0
    %233 = vmatprep.subr.mxu0 0.0
    %234 = vmatpush2.msra.mxu0 0.0
    %235 = vmatprep.subr.mxu0 0.0
    %236 = vmatpush2.msra.mxu0 0.0
    %237 = vmatprep.subr.mxu0 0.0
    %238 = vmatpush2.msra.mxu0 0.0
    %239 = vmatprep.subr.mxu0 0.0
    %240 = vmatpush2.msra.mxu0 0.0
    %241 = vmatprep.subr.mxu0 0.0
    %242 = vmatpush2.msra.mxu0 0.0
    %243 = vmatprep.subr.mxu0 0.0
    %244 = vmatpush2.msra.mxu0 0.0
    %245 = vmatprep.subr.mxu0 0.0
    %246 = vmatpush2.msra.mxu0 0.0
    %247 = vmatprep.mubr.f32.mxu0 0.0
    %248 = vmatmul.mubr.f32.gmra.mxu0 %v40
    %v249 = vpop.f32.mrf.mxu0
    %v250 = vadd.f32 0.0, %v249
    %v251 = vpop.f32.mrf.mxu0
    %v252 = vadd.f32 0.0, %v251
    %253 = vmatprep.mubr.f32.mxu0 0.0
    %254 = vmatmul.mubr.f32.gmra.mxu0 %v41
    %v255 = vpop.f32.mrf.mxu0
    %v256 = vadd.f32 0.0, %v255
    %v257 = vpop.f32.mrf.mxu0
    %v258 = vadd.f32 0.0, %v257
    %259 = vdwg.mxu0
    %260 = vst [vmem:[#allocation7] sm:$0xff] %v173
    %261 = vst [vmem:[#allocation7 + $0x8] sm:$0xff] %v175
    %262 = vst [vmem:[#allocation7 + $0x10] sm:$0xff] %v250
    %263 = vst [vmem:[#allocation7 + $0x18] sm:$0xff] %v252
    %264 = vst [vmem:[#allocation7 + $0x20] sm:$0xff] %v179
    %265 = vst [vmem:[#allocation7 + $0x28] sm:$0xff] %v181
    %266 = vst [vmem:[#allocation7 + $0x30] sm:$0xff] %v256
    %267 = vst [vmem:[#allocation7 + $0x38] sm:$0xff] %v258
    // Predicated region
    $region18: #{tpu_custom_call.1} parent=1 // pred_check
      _
    $region19: #{tpu_custom_call.1} parent=1 // pred_check_branch
      %269 = sbr.rel (0) target = $region21
    $region20: #{tpu_custom_call.1} parent=1 // pred_region
      %s271 = ssub.s32 1024, 1024
      %272 = vsyncadd [#allocation4], %s271
      %s273 = sshll.u32 [#allocation7], 4
      %s274 = int_to_ptr.vmem [resolvable:$true] %s273
      %279 = dma.vmem_to_hbm [thread:$0]  %s274, 1024, %s2, [#allocation4], 512, 512, 32
    $region21: #{tpu_custom_call.1} parent=1 // pred_fallthru
      _
    // Predicated region
    $region22: #{tpu_custom_call.1} parent=1 // pred_check
      _
    $region23: #{tpu_custom_call.1} parent=1 // pred_check_branch
      %281 = sbr.rel (0) target = $region25
    $region24: #{tpu_custom_call.1} parent=1 // pred_region
      %282 = dma.done [#allocation4], 1024
    $region25: #{tpu_custom_call.1} parent=1 // pred_fallthru
      _
    %283 = vsyncpa [#allocation3], 1
    %284 = vsyncpa [#allocation6], 1
    %285 = vsyncpa [#allocation4], 1

</llo_original>
